<compile_context>
chip_gen: v7x
topology: tpu7x:2x2x1
jax: 0.10.0
libtpu: 0.0.40
codegen_flags: <defaults>
</compile_context>

<pallas_src>
import functools

import jax
import jax.numpy as jnp
from jax.experimental import pallas as pl
from jax.experimental.pallas import tpu as pltpu


def _round_up(x: int, m: int) -> int:
    return ((x + m - 1) // m) * m


def _time_encoding_kernel(x_ref, w_ref, b_ref, g_ref, beta_ref, o_ref, *, d_real):
    # x_ref: (TB, D) f32   w_ref: (D, D) f32   b/g/beta: (1, D) f32   o_ref: (TB, D) f32
    x = x_ref[...]

    # Linear (+ bias) + ReLU.  f32 operands, f32 accumulate (MXU handles f32 via passes;
    # the matmul is a negligible fraction of this DMA-bound kernel at D=32).
    h = jnp.dot(x, w_ref[...], preferred_element_type=jnp.float32)       # (TB, D)
    h = jnp.maximum(h + b_ref[...], 0.0)

    # Residual (dropout p=0 is a no-op, shortcut is identity).
    s = x + h

    # LayerNorm over the real feature dim (block is exactly D wide -> no masking).
    # Single-pass moments: var = E[s^2] - mean^2 (biased, eps inside sqrt = PyTorch).
    inv_d = jnp.float32(1.0 / d_real)
    mean = jnp.sum(s, axis=-1, keepdims=True) * inv_d
    var = jnp.sum(s * s, axis=-1, keepdims=True) * inv_d - mean * mean
    inv = jax.lax.rsqrt(var + 1e-6)
    c = s - mean

    o_ref[...] = (c * inv * g_ref[...] + beta_ref[...]).astype(o_ref.dtype)


def time_encoding_forward(time, w, b, gamma, beta, *, tb=1024):
    """time: (B, D) f32; w: (D, D) (in, out); b/gamma/beta: (D,)."""
    B, D = time.shape

    # Sublane-aligned batch tile; no padding of the arrays themselves.
    TB = min(tb, _round_up(B, 8))
    grid = (pl.cdiv(B, TB),)

    x = time.astype(jnp.float32)
    w_f = w.astype(jnp.float32)
    b_f = b.astype(jnp.float32).reshape(1, D)
    g_f = gamma.astype(jnp.float32).reshape(1, D)
    be_f = beta.astype(jnp.float32).reshape(1, D)

    cost = pl.CostEstimate(
        flops=2 * B * D * D + 10 * B * D,
        transcendentals=B,                         # one rsqrt per row
        bytes_accessed=B * D * 4                   # x
        + D * D * 4                                # W (f32, DMA'd once)
        + 3 * D * 4                                # b, gamma, beta
        + B * D * 4,                               # out
    )

    out = pl.pallas_call(
        functools.partial(_time_encoding_kernel, d_real=D),
        out_shape=jax.ShapeDtypeStruct((B, D), time.dtype),
        grid_spec=pl.GridSpec(
            grid=grid,
            in_specs=[
                pl.BlockSpec((TB, D), lambda i: (i, 0)),   # x: tiled over batch
                pl.BlockSpec((D, D), lambda i: (0, 0)),    # W: VMEM-resident
                pl.BlockSpec((1, D), lambda i: (0, 0)),    # bias
                pl.BlockSpec((1, D), lambda i: (0, 0)),    # gamma
                pl.BlockSpec((1, D), lambda i: (0, 0)),    # beta
            ],
            out_specs=pl.BlockSpec((TB, D), lambda i: (i, 0)),
        ),
        compiler_params=pltpu.CompilerParams(
            dimension_semantics=("parallel",),     # megacore-shardable batch axis (v7x)
        ),
        cost_estimate=cost,
    )(x, w_f, b_f, g_f, be_f)

    return out


def reference_forward(time, w, b, gamma, beta):
    # Pure-f32 reference (PyTorch semantics: biased variance, eps inside sqrt).
    h = jnp.maximum(time @ w + b, 0.0)
    s = time + h
    mean = jnp.mean(s, axis=-1, keepdims=True)
    var = jnp.mean((s - mean) ** 2, axis=-1, keepdims=True)
    norm = (s - mean) / jnp.sqrt(var + 1e-6)
    return norm * gamma + beta


if __name__ == "__main__":
    key = jax.random.PRNGKey(0)
    D = 32  # input_size (= output_size)

    k_time, k_w, k_b, _, _ = jax.random.split(key, 5)
    bound = 1.0 / jnp.sqrt(jnp.float32(D))
    w = jax.random.uniform(k_w, (D, D), minval=-bound, maxval=bound, dtype=jnp.float32)
    b = jax.random.uniform(k_b, (D,), minval=-bound, maxval=bound, dtype=jnp.float32)
    gamma = jnp.ones((D,), dtype=jnp.float32)   # LayerNorm default init
    beta = jnp.zeros((D,), dtype=jnp.float32)

    # Case 1: small shape, single grid step.
    B1 = 8
    t1 = jax.random.normal(k_time, (B1, D), dtype=jnp.float32)
    out1 = time_encoding_forward(t1, w, b, gamma, beta)
    jax.block_until_ready(out1)
    ref1 = reference_forward(t1, w, b, gamma, beta)
    assert out1.shape == (B1, D)
    assert jnp.allclose(out1, ref1, atol=2e-4, rtol=2e-4), "mismatch vs JAX reference (case 1)"

    # Case 2: batch not a multiple of the tile -> exercises partial final block clipping.
    B2 = 10
    t2 = jax.random.normal(jax.random.PRNGKey(1), (B2, D), dtype=jnp.float32)
    out2 = time_encoding_forward(t2, w, b, gamma, beta, tb=8)
    jax.block_until_ready(out2)
    ref2 = reference_forward(t2, w, b, gamma, beta)
    assert out2.shape == (B2, D)
    assert jnp.allclose(out2, ref2, atol=2e-4, rtol=2e-4), "mismatch vs JAX reference (case 2)"

    # Case 3: multi-step grid with a clipped last tile (pipeline + masking path).
    B3 = 70
    t3 = jax.random.normal(jax.random.PRNGKey(2), (B3, D), dtype=jnp.float32)
    out3 = time_encoding_forward(t3, w, b, gamma, beta, tb=32)
    jax.block_until_ready(out3)
    ref3 = reference_forward(t3, w, b, gamma, beta)
    assert out3.shape == (B3, D)
    assert jnp.allclose(out3, ref3, atol=2e-4, rtol=2e-4), "mismatch vs JAX reference (case 3)"

    print("KERNEL_OK")
</pallas_src>

<mosaic_0001>
module attributes {stable_mosaic.version = 11 : i64} {
  func.func @_time_encoding_kernel(%arg0: i32, %arg1: memref<8x32xf32, #tpu.memory_space<vmem>>, %arg2: memref<32x32xf32, #tpu.memory_space<vmem>>, %arg3: memref<1x32xf32, #tpu.memory_space<vmem>>, %arg4: memref<1x32xf32, #tpu.memory_space<vmem>>, %arg5: memref<1x32xf32, #tpu.memory_space<vmem>>, %arg6: memref<8x32xf32, #tpu.memory_space<vmem>>) attributes {dimension_semantics = [#tpu.dimension_semantics<parallel>], iteration_bounds = array<i64: 1>, scalar_prefetch = 0 : i64, scratch_operands = 0 : i64, tpu.core_type = #tpu.core_type<tc>, window_params = [{transform_indices = @transform_0, window_bounds = array<i64: 8, 32>}, {pipeline_mode = #tpu.pipeline_mode<synchronous>, transform_indices = @transform_1, window_bounds = array<i64: 32, 32>}, {pipeline_mode = #tpu.pipeline_mode<synchronous>, transform_indices = @transform_2, window_bounds = array<i64: 1, 32>}, {pipeline_mode = #tpu.pipeline_mode<synchronous>, transform_indices = @transform_3, window_bounds = array<i64: 1, 32>}, {pipeline_mode = #tpu.pipeline_mode<synchronous>, transform_indices = @transform_4, window_bounds = array<i64: 1, 32>}, {transform_indices = @transform_5, window_bounds = array<i64: 8, 32>}]} {
    %c0 = arith.constant 0 : index
    %c0_0 = arith.constant 0 : index
    %0 = vector.load %arg1[%c0, %c0_0] : memref<8x32xf32, #tpu.memory_space<vmem>>, vector<8x32xf32>
    %c0_1 = arith.constant 0 : index
    %c0_2 = arith.constant 0 : index
    %1 = vector.load %arg2[%c0_1, %c0_2] : memref<32x32xf32, #tpu.memory_space<vmem>>, vector<32x32xf32>
    %cst = arith.constant dense<0.000000e+00> : vector<8x32xf32>
    %2 = tpu.matmul %0, %1, %cst {dimension_numbers = #tpu.dot_dimension_numbers<[1], [0], [0], [1], [0, 0, 1, 1], [], []>} : vector<8x32xf32>, vector<32x32xf32>, vector<8x32xf32> -> vector<8x32xf32>
    %c0_3 = arith.constant 0 : index
    %c0_4 = arith.constant 0 : index
    %3 = vector.load %arg3[%c0_3, %c0_4] : memref<1x32xf32, #tpu.memory_space<vmem>>, vector<1x32xf32>
    %4 = vector.broadcast %3 : vector<1x32xf32> to vector<8x32xf32>
    %5 = arith.addf %2, %4 : vector<8x32xf32>
    %cst_5 = arith.constant 0.000000e+00 : f32
    %6 = vector.broadcast %cst_5 : f32 to vector<8x32xf32>
    %7 = arith.maximumf %5, %6 : vector<8x32xf32>
    %8 = arith.addf %0, %7 : vector<8x32xf32>
    %cst_6 = arith.constant dense<0.000000e+00> : vector<8xf32>
    %9 = vector.multi_reduction <add>, %8, %cst_6 [1] : vector<8x32xf32> to vector<8xf32>
    %10 = vector.shape_cast %9 : vector<8xf32> to vector<8x1xf32>
    %cst_7 = arith.constant 3.125000e-02 : f32
    %11 = vector.broadcast %cst_7 : f32 to vector<8x1xf32>
    %12 = arith.mulf %10, %11 : vector<8x1xf32>
    %13 = arith.mulf %8, %8 : vector<8x32xf32>
    %cst_8 = arith.constant dense<0.000000e+00> : vector<8xf32>
    %14 = vector.multi_reduction <add>, %13, %cst_8 [1] : vector<8x32xf32> to vector<8xf32>
    %15 = vector.shape_cast %14 : vector<8xf32> to vector<8x1xf32>
    %cst_9 = arith.constant 3.125000e-02 : f32
    %16 = vector.broadcast %cst_9 : f32 to vector<8x1xf32>
    %17 = arith.mulf %15, %16 : vector<8x1xf32>
    %18 = arith.mulf %12, %12 : vector<8x1xf32>
    %19 = arith.subf %17, %18 : vector<8x1xf32>
    %cst_10 = arith.constant 9.99999997E-7 : f32
    %20 = vector.broadcast %cst_10 : f32 to vector<8x1xf32>
    %21 = arith.addf %19, %20 : vector<8x1xf32>
    %22 = math.rsqrt %21 : vector<8x1xf32>
    %23 = vector.broadcast %12 : vector<8x1xf32> to vector<8x32xf32>
    %24 = arith.subf %8, %23 : vector<8x32xf32>
    %25 = vector.broadcast %22 : vector<8x1xf32> to vector<8x32xf32>
    %26 = arith.mulf %24, %25 : vector<8x32xf32>
    %c0_11 = arith.constant 0 : index
    %c0_12 = arith.constant 0 : index
    %27 = vector.load %arg4[%c0_11, %c0_12] : memref<1x32xf32, #tpu.memory_space<vmem>>, vector<1x32xf32>
    %28 = vector.broadcast %27 : vector<1x32xf32> to vector<8x32xf32>
    %29 = arith.mulf %26, %28 : vector<8x32xf32>
    %c0_13 = arith.constant 0 : index
    %c0_14 = arith.constant 0 : index
    %30 = vector.load %arg5[%c0_13, %c0_14] : memref<1x32xf32, #tpu.memory_space<vmem>>, vector<1x32xf32>
    %31 = vector.broadcast %30 : vector<1x32xf32> to vector<8x32xf32>
    %32 = arith.addf %29, %31 : vector<8x32xf32>
    %c0_15 = arith.constant 0 : index
    %c0_16 = arith.constant 0 : index
    %33 = vector.load %arg6[%c0_15, %c0_16] : memref<8x32xf32, #tpu.memory_space<vmem>>, vector<8x32xf32>
    tpu.vector_store %arg6[%c0_15, %c0_16], %32 {strides = array<i32>} : memref<8x32xf32, #tpu.memory_space<vmem>>, vector<8x32xf32>,
    return
  }
  func.func @transform_0(%arg0: i32) -> (i32, i32) {
    %c0_i32 = arith.constant 0 : i32
    %c0_i32_0 = arith.constant 0 : i32
    return %arg0, %c0_i32 : i32, i32
  }
  func.func @transform_1(%arg0: i32) -> (i32, i32) {
    %c0_i32 = arith.constant 0 : i32
    %c0_i32_0 = arith.constant 0 : i32
    %c0_i32_1 = arith.constant 0 : i32
    return %c0_i32, %c0_i32_0 : i32, i32
  }
  func.func @transform_2(%arg0: i32) -> (i32, i32) {
    %c0_i32 = arith.constant 0 : i32
    %c0_i32_0 = arith.constant 0 : i32
    %c0_i32_1 = arith.constant 0 : i32
    return %c0_i32, %c0_i32_0 : i32, i32
  }
  func.func @transform_3(%arg0: i32) -> (i32, i32) {
    %c0_i32 = arith.constant 0 : i32
    %c0_i32_0 = arith.constant 0 : i32
    %c0_i32_1 = arith.constant 0 : i32
    return %c0_i32, %c0_i32_0 : i32, i32
  }
  func.func @transform_4(%arg0: i32) -> (i32, i32) {
    %c0_i32 = arith.constant 0 : i32
    %c0_i32_0 = arith.constant 0 : i32
    %c0_i32_1 = arith.constant 0 : i32
    return %c0_i32, %c0_i32_0 : i32, i32
  }
  func.func @transform_5(%arg0: i32) -> (i32, i32) {
    %c0_i32 = arith.constant 0 : i32
    %c0_i32_0 = arith.constant 0 : i32
    return %arg0, %c0_i32 : i32, i32
  }
}

</mosaic_0001>

<llo_original>
// kernel: tpu_custom_call.1
$region0: #{tpu_custom_call.1}
  #allocation0 [shape = 'u32[]', space=smem, size = 0x4, offset = 0x4, fixed_abs, tag = 'smem constant byte address 0x4 - core index']
  #allocation1 [shape = 'u32[144,128]{1,0:T(1,128)}', space=vmem, size = 0x12000, scoped, tag = 'internal scratch']
  %s0 = inlined_call_operand.hbm [shape: f32[8,32], index: 0, kind: input, shape index: {}]
  %s1 = inlined_call_operand.hbm [shape: f32[32,32], index: 1, kind: input, shape index: {}]
  %s2 = inlined_call_operand.vmem [shape: f32[1,32], index: 2, kind: input, shape index: {}]
  %s3 = inlined_call_operand.vmem [shape: f32[1,32], index: 3, kind: input, shape index: {}]
  %s4 = inlined_call_operand.vmem [shape: f32[1,32], index: 4, kind: input, shape index: {}]
  %s5 = inlined_call_operand.hbm [shape: f32[8,32], index: 5, kind: output, shape index: {}]
  %s6 = sld [smem:[#allocation0]]
  $region38: #{tpu_custom_call.1} parent=0
    _
  %s8 = ssub.s32 1, %s6
  %s9 = scalar_select 0, %s8, %s6
  $region1: #{tpu_custom_call.1} parent=0
    #allocation2 [shape = 'u8[4096]{0}', space=vmem, size = 0x1000, scoped, tag = 'input window, operand 0, single buffered']
    #allocation3 [shape = 's32[1]{0}', space=sflag, size = 0x4, scoped, tag = 'scoped memory for tpu_custom_call.1']
    #allocation4 [shape = 's32[1]{0}', space=sflag, size = 0x4, scoped, tag = 'scoped memory for tpu_custom_call.1']
    #allocation5 [shape = 'u8[16384]{0}', space=vmem, size = 0x4000, scoped, tag = 'input window, operand 1, single buffered']
    #allocation6 [shape = 's32[1]{0}', space=sflag, size = 0x4, scoped, tag = 'scoped memory for tpu_custom_call.1']
    #allocation7 [shape = 'u8[4096]{0}', space=vmem, size = 0x1000, scoped, tag = 'output window, operand 0, single buffered']
    %10 = vsyncpa [#allocation3], 0
    %11 = vsyncpa [#allocation6], 0
    %12 = vsyncpa [#allocation4], 0
    // Predicated region
    $region2: #{tpu_custom_call.1} parent=1 // pred_check
      _
    $region3: #{tpu_custom_call.1} parent=1 // pred_check_branch
      %14 = sbr.rel (0) target = $region5
    $region4: #{tpu_custom_call.1} parent=1 // pred_region
      %s16 = ssub.s32 128, 128
      %17 = vsyncadd [#allocation3], %s16
      %s19 = sshll.u32 [#allocation2], 4
      %s20 = int_to_ptr.vmem [resolvable:$true] %s19
      %22 = dma.hbm_to_vmem [thread:$0]  %s0, 128, %s20, [#allocation3]
    $region5: #{tpu_custom_call.1} parent=1 // pred_fallthru
      _
    // Predicated region
    $region6: #{tpu_custom_call.1} parent=1 // pred_check
      _
    $region7: #{tpu_custom_call.1} parent=1 // pred_check_branch
      %24 = sbr.rel (0) target = $region9
    $region8: #{tpu_custom_call.1} parent=1 // pred_region
      %s26 = ssub.s32 512, 512
      %27 = vsyncadd [#allocation6], %s26
      %s28 = sshll.u32 [#allocation5], 4
      %s29 = int_to_ptr.vmem [resolvable:$true] %s28
      %34 = dma.hbm_to_vmem [thread:$0]  %s1, 512, %s29, [#allocation6], 128, 128, 8
    $region9: #{tpu_custom_call.1} parent=1 // pred_fallthru
      _
    // Predicated region
    $region10: #{tpu_custom_call.1} parent=1 // pred_check
      _
    $region11: #{tpu_custom_call.1} parent=1 // pred_check_branch
      %36 = sbr.rel (0) target = $region13
    $region12: #{tpu_custom_call.1} parent=1 // pred_region
      _
    $region13: #{tpu_custom_call.1} parent=1 // pred_fallthru
      _
    // Predicated region
    $region14: #{tpu_custom_call.1} parent=1 // pred_check
      _
    $region15: #{tpu_custom_call.1} parent=1 // pred_check_branch
      %38 = sbr.rel (0) target = $region17
    $region16: #{tpu_custom_call.1} parent=1 // pred_region
      _
    $region17: #{tpu_custom_call.1} parent=1 // pred_fallthru
      _
    // Predicated region
    $region18: #{tpu_custom_call.1} parent=1 // pred_check
      _
    $region19: #{tpu_custom_call.1} parent=1 // pred_check_branch
      %40 = sbr.rel (0) target = $region21
    $region20: #{tpu_custom_call.1} parent=1 // pred_region
      _
    $region21: #{tpu_custom_call.1} parent=1 // pred_fallthru
      _
    // Predicated region
    $region22: #{tpu_custom_call.1} parent=1 // pred_check
      _
    $region23: #{tpu_custom_call.1} parent=1 // pred_check_branch
      %42 = sbr.rel (0) target = $region25
    $region24: #{tpu_custom_call.1} parent=1 // pred_region
      %43 = dma.done [#allocation3], 128
    $region25: #{tpu_custom_call.1} parent=1 // pred_fallthru
      _
    // Predicated region
    $region26: #{tpu_custom_call.1} parent=1 // pred_check
      _
    $region27: #{tpu_custom_call.1} parent=1 // pred_check_branch
      %45 = sbr.rel (0) target = $region29
    $region28: #{tpu_custom_call.1} parent=1 // pred_region
      %46 = dma.done [#allocation6], 512
    $region29: #{tpu_custom_call.1} parent=1 // pred_fallthru
      _
    %v47 = vld [vmem:[#allocation2] sm:$0xff]
    %v48 = vld [vmem:[#allocation5] sm:$0xff]
    %v49 = vld [vmem:[#allocation5 + $0x8] sm:$0xff]
    %v50 = vld [vmem:[#allocation5 + $0x10] sm:$0xff]
    %v51 = vld [vmem:[#allocation5 + $0x18] sm:$0xff]
    %v52 = vld [vmem:[%s2] sm:$0x1]
    %v54 = vlaneseq
    %v55 = vshrl.u32 %v54, 7
    %v56 = vsub.s32 0, %v55
    %v57 = vrot.slane %v52, %v56
    %vm59 = vcmask 261120
    %v61 = vsel %vm59, %v47, 0
    %63 = vmatprep.subr.mxu0 0.0
    %64 = vmatpush1.msra.mxu0 %v48
    %65 = vmatprep.subr.mxu0 0.0
    %66 = vmatpush1.msra.mxu0 %v49
    %67 = vmatprep.subr.mxu0 0.0
    %68 = vmatpush1.msra.mxu0 %v50
    %69 = vmatprep.subr.mxu0 0.0
    %70 = vmatpush1.msra.mxu0 %v51
    %71 = vmatprep.subr.mxu0 0.0
    %72 = vmatpush1.msra.mxu0 0.0
    %73 = vmatprep.subr.mxu0 0.0
    %74 = vmatpush1.msra.mxu0 0.0
    %75 = vmatprep.subr.mxu0 0.0
    %76 = vmatpush1.msra.mxu0 0.0
    %77 = vmatprep.subr.mxu0 0.0
    %78 = vmatpush1.msra.mxu0 0.0
    %79 = vmatprep.subr.mxu0 0.0
    %80 = vmatpush1.msra.mxu0 0.0
    %81 = vmatprep.subr.mxu0 0.0
    %82 = vmatpush1.msra.mxu0 0.0
    %83 = vmatprep.subr.mxu0 0.0
    %84 = vmatpush1.msra.mxu0 0.0
    %85 = vmatprep.subr.mxu0 0.0
    %86 = vmatpush1.msra.mxu0 0.0
    %87 = vmatprep.subr.mxu0 0.0
    %88 = vmatpush1.msra.mxu0 0.0
    %89 = vmatprep.subr.mxu0 0.0
    %90 = vmatpush1.msra.mxu0 0.0
    %91 = vmatprep.subr.mxu0 0.0
    %92 = vmatpush1.msra.mxu0 0.0
    %93 = vmatprep.subr.mxu0 0.0
    %94 = vmatpush1.msra.mxu0 0.0
    %95 = vmatprep.subr.mxu0 0.0
    %96 = vmatpush1.msra.mxu0 0.0
    %97 = vmatprep.subr.mxu0 0.0
    %98 = vmatpush1.msra.mxu0 0.0
    %99 = vmatprep.subr.mxu0 0.0
    %100 = vmatpush1.msra.mxu0 0.0
    %101 = vmatprep.subr.mxu0 0.0
    %102 = vmatpush1.msra.mxu0 0.0
    %103 = vmatprep.subr.mxu0 0.0
    %104 = vmatpush1.msra.mxu0 0.0
    %105 = vmatprep.subr.mxu0 0.0
    %106 = vmatpush1.msra.mxu0 0.0
    %107 = vmatprep.subr.mxu0 0.0
    %108 = vmatpush1.msra.mxu0 0.0
    %109 = vmatprep.subr.mxu0 0.0
    %110 = vmatpush1.msra.mxu0 0.0
    %111 = vmatprep.subr.mxu0 0.0
    %112 = vmatpush1.msra.mxu0 0.0
    %113 = vmatprep.subr.mxu0 0.0
    %114 = vmatpush1.msra.mxu0 0.0
    %115 = vmatprep.subr.mxu0 0.0
    %116 = vmatpush1.msra.mxu0 0.0
    %117 = vmatprep.subr.mxu0 0.0
    %118 = vmatpush1.msra.mxu0 0.0
    %119 = vmatprep.subr.mxu0 0.0
    %120 = vmatpush1.msra.mxu0 0.0
    %121 = vmatprep.subr.mxu0 0.0
    %122 = vmatpush1.msra.mxu0 0.0
    %123 = vmatprep.subr.mxu0 0.0
    %124 = vmatpush1.msra.mxu0 0.0
    %125 = vmatprep.subr.mxu0 0.0
    %126 = vmatpush1.msra.mxu0 0.0
    %127 = vmatprep.mubr.f32.mxu0 0.0
    %128 = vmatmul.mubr.f32.gmra.mrb[0].mxu0 %v61
    %v129 = vpop.f32.mrb[0].mxu0
    %v130 = vadd.f32 %v57, %v129
    %v131 = vpop.f32.mrb[0].mxu0
    %132 = vdwg.mxu0
    %v133 = vmax.f32 %v130, 0.0
    %v134 = vadd.f32 %v47, %v133
    %v135 = vsel %vm59, %v134, 0.0
    %136 = vadd.xlane.f32.xlu0 %v135
    %v137 = vpop.xlane.xlu0 %136
    %v138 = vmul.f32 %v137, 0.03125
    %v139 = vmul.f32 %v134, %v134
    %v140 = vsel %vm59, %v139, 0.0
    %141 = vadd.xlane.f32.xlu0 %v140
    %v142 = vpop.xlane.xlu0 %141
    %v143 = vmul.f32 %v142, 0.03125
    %v144 = vmul.f32 %v138, %v138
    %v145 = vsub.f32 %v143, %v144
    %v146 = vadd.f32 %v145, 1e-06
    %v147 = vrsqrt.pop %v146
    %v148 = vsub.f32 %v134, %v138
    %v149 = vmul.f32 %v148, %v147
    %v150 = vld [vmem:[%s3] sm:$0x1]
    %v152 = vlaneseq
    %v153 = vshrl.u32 %v152, 7
    %v154 = vsub.s32 0, %v153
    %v155 = vrot.slane %v150, %v154
    %v157 = vmul.f32 %v149, %v155
    %v158 = vld [vmem:[%s4] sm:$0x1]
    %v160 = vlaneseq
    %v161 = vshrl.u32 %v160, 7
    %v162 = vsub.s32 0, %v161
    %v163 = vrot.slane %v158, %v162
    %v165 = vadd.f32 %v157, %v163
    %166 = vst.msk [vmem:[#allocation7] sm:$0xff] %vm59, %v165
    // Predicated region
    $region30: #{tpu_custom_call.1} parent=1 // pred_check
      _
    $region31: #{tpu_custom_call.1} parent=1 // pred_check_branch
      %168 = sbr.rel (0) target = $region33
    $region32: #{tpu_custom_call.1} parent=1 // pred_region
      %s170 = ssub.s32 128, 128
      %171 = vsyncadd [#allocation4], %s170
      %s173 = sshll.u32 [#allocation7], 4
      %s174 = int_to_ptr.vmem [resolvable:$true] %s173
      %176 = dma.vmem_to_hbm [thread:$0]  %s174, 128, %s5, [#allocation4]
    $region33: #{tpu_custom_call.1} parent=1 // pred_fallthru
      _
    // Predicated region
    $region34: #{tpu_custom_call.1} parent=1 // pred_check
      _
    $region35: #{tpu_custom_call.1} parent=1 // pred_check_branch
      %178 = sbr.rel (0) target = $region37
    $region36: #{tpu_custom_call.1} parent=1 // pred_region
      %179 = dma.done [#allocation4], 128
    $region37: #{tpu_custom_call.1} parent=1 // pred_fallthru
      _
    %180 = vsyncpa [#allocation3], 1
    %181 = vsyncpa [#allocation6], 1
    %182 = vsyncpa [#allocation4], 1

</llo_original>
